<compile_context>
chip_gen: v5e
topology: v5e:2x2
jax: 0.10.0
libtpu: 0.0.40
codegen_flags: <defaults>
</compile_context>

<pallas_src>
import functools

import jax
import jax.numpy as jnp
from jax.experimental import pallas as pl
from jax.experimental.pallas import tpu as pltpu


def _round_up(x, m):
    return (x + m - 1) // m * m


# ----------------------------- Pallas kernel --------------------------------
def _mlp_kernel(x_ref, w1a_ref, w1c_ref, w2_ref, wh_ref, o_ref, *,
                vocab, apply_sigmoid):
    # x_ref: [10, TB] feature-major slab (batch on lanes).
    bbox = x_ref[0:8, :]                                # [8, TB]  src|tgt bbox
    ids = x_ref[8:10, :]                                # [2, TB]  f32-encoded ids
    sid = ids[0:1, :].astype(jnp.int32)                 # [1, TB]
    tid = ids[1:2, :].astype(jnp.int32)                 # [1, TB]
    tb = bbox.shape[1]

    # Single in-register one-hot over the stacked [src | tgt] vocab (no HBM
    # gather).  Ids are clamped to [0, V) in the wrapper, so rows 0..V-1 can
    # only match sid and rows V..2V-1 can only match tid + V.
    row = jax.lax.broadcasted_iota(jnp.int32, (2 * vocab, tb), 0)
    oh = ((row == sid) | (row == (tid + vocab))).astype(jnp.float32)   # [2V, TB]

    # Layer 0 (fused): bbox dot + class dot.  Embedding lookup, concat and b1
    # are folded into w1c; the last output row is a constant-1 channel.
    h = (jnp.dot(w1a_ref[...], bbox, preferred_element_type=jnp.float32)
         + jnp.dot(w1c_ref[...], oh, preferred_element_type=jnp.float32))
    h = jnp.maximum(h, 0.0)                             # [H1+1, TB]

    # Layer 1 (fused): [w2^T | b2] plus pass-through row for the 1-channel.
    h = jnp.dot(w2_ref[...], h, preferred_element_type=jnp.float32)
    h = jnp.maximum(h, 0.0)                             # [H2+1, TB]

    # Head (N=1): VPU multiply + sublane (XLU) reduce; bh folded into wh via
    # the constant-1 channel.
    out = jnp.sum(h * wh_ref[...], axis=0, keepdims=True)   # [1, TB]
    if apply_sigmoid:                                    # static trace-time flag
        out = jax.nn.sigmoid(out)
    o_ref[...] = out.astype(o_ref.dtype)


# ------------------------------ wrapper --------------------------------------
def mlp_pallas(src_bbox, tgt_bbox, src_cls, tgt_cls, params,
               apply_sigmoid=False, tile_b=2048):
    """Returns [B, 1] float32 scores (matches MLP.forward)."""
    f32 = jnp.float32
    B = src_bbox.shape[0]
    emb = params["class_embed"].astype(f32)
    w1 = params["w1"].astype(f32)
    V, E = emb.shape
    H1 = w1.shape[1]
    H2 = params["w2"].shape[1]

    # ---- batch tiling: big lane-dense tiles, >=2 tiles for large batches ----
    b128 = _round_up(B, 128)
    cap = _round_up(min(tile_b, b128), 128)
    n_tiles = pl.cdiv(b128, cap)
    # v7x has 2 TensorCores that split "parallel" grid axes: keep >= 2 tiles
    # for large batches so one giant tile doesn't serialize onto a single core.
    if n_tiles == 1 and b128 >= 2048:
        n_tiles = 2
    tile = _round_up(pl.cdiv(b128, n_tiles), 128)
    b_pad = n_tiles * tile
    pad = b_pad - B

    # ---- coalesced streaming input: one [10, Bp] f32 slab (one DMA/step) ----
    sid = jnp.clip(src_cls.astype(jnp.int32), 0, V - 1).astype(f32)[:, None]
    tid = jnp.clip(tgt_cls.astype(jnp.int32), 0, V - 1).astype(f32)[:, None]
    x = jnp.concatenate([src_bbox.astype(f32), tgt_bbox.astype(f32), sid, tid],
                        axis=1)                                        # [B, 10]
    x = jnp.pad(x, ((0, pad), (0, 0))).T                               # [10, Bp]

    # ---- fold embedding table + every bias into VMEM-resident weights ----
    hi = jax.lax.Precision.HIGHEST
    b1 = params["b1"].astype(f32).reshape(H1)
    b2 = params["b2"].astype(f32).reshape(H2)
    wh = params["wh"].astype(f32).reshape(H2)
    bh = params["bh"].astype(f32).reshape(1)

    # layer 0, bbox part: [H1+1, 8] (zero row for the constant-1 channel)
    w1a = jnp.concatenate([w1[0:4, :].T, w1[4 + E:8 + E, :].T], axis=1)
    w1a = jnp.concatenate([w1a, jnp.zeros((1, 8), f32)], axis=0)        # [H1+1, 8]

    # layer 0, class part: embedding folded in; b1 folded into the src half
    # (each src one-hot column has exactly one 1); ones-row makes channel H1==1.
    f1s = jnp.dot(emb, w1[4:4 + E, :], precision=hi).T + b1[:, None]    # [H1, V]
    f1t = jnp.dot(emb, w1[8 + E:8 + 2 * E, :], precision=hi).T          # [H1, V]
    ones_row = jnp.concatenate([jnp.ones((1, V), f32),
                                jnp.zeros((1, V), f32)], axis=1)
    w1c = jnp.concatenate([jnp.concatenate([f1s, f1t], axis=1), ones_row],
                          axis=0)                                       # [H1+1, 2V]

    # layer 1: [w2^T | b2] + pass-through row carrying the constant-1 channel
    w2f = jnp.concatenate([params["w2"].astype(f32).T, b2[:, None]], axis=1)
    pass_row = jnp.concatenate([jnp.zeros((1, H1), f32),
                                jnp.ones((1, 1), f32)], axis=1)
    w2f = jnp.concatenate([w2f, pass_row], axis=0)                      # [H2+1, H1+1]

    # head: [wh ; bh]
    whf = jnp.concatenate([wh, bh], axis=0)[:, None]                    # [H2+1, 1]

    def resident(shape):  # weights stay VMEM-resident across all grid steps
        return pl.BlockSpec(shape, lambda i: (0, 0))

    flops = 2.0 * b_pad * ((H1 + 1) * (8 + 2 * V) + (H2 + 1) * (H1 + 1)
                           + (H2 + 1))
    bytes_accessed = 4.0 * (b_pad * 11 + (H1 + 1) * (8 + 2 * V)
                            + (H2 + 1) * (H1 + 2))

    out = pl.pallas_call(
        functools.partial(_mlp_kernel, vocab=V, apply_sigmoid=apply_sigmoid),
        out_shape=jax.ShapeDtypeStruct((1, b_pad), f32),
        grid=(n_tiles,),
        in_specs=[
            pl.BlockSpec((10, tile), lambda i: (0, i)),   # streamed input slab
            resident((H1 + 1, 8)),
            resident((H1 + 1, 2 * V)),
            resident((H2 + 1, H1 + 1)),
            resident((H2 + 1, 1)),
        ],
        out_specs=pl.BlockSpec((1, tile), lambda i: (0, i)),   # lane-dense
        compiler_params=pltpu.CompilerParams(
            dimension_semantics=("parallel",)),
        cost_estimate=pl.CostEstimate(
            flops=int(flops),
            transcendentals=int(b_pad) if apply_sigmoid else 0,
            bytes_accessed=int(bytes_accessed)),
    )(x, w1a, w1c, w2f, whf)

    # lane-dense [1, b_pad] -> [B, 1]
    return out.reshape(-1)[:B][:, None]


def forward(params, batch, apply_sigmoid=False):
    """Reproduces MLP.forward semantics."""
    return mlp_pallas(batch["source_bbox"], batch["target_bbox"],
                      batch["source_class"], batch["target_class"],
                      params, apply_sigmoid)


def forward_ref(params, batch, apply_sigmoid=False):
    """Pure-JAX reference for correctness checking."""
    emb = params["class_embed"]
    src_cls = jnp.take(emb, batch["source_class"], axis=0)
    tgt_cls = jnp.take(emb, batch["target_class"], axis=0)
    x = jnp.concatenate(
        [batch["source_bbox"], src_cls, batch["target_bbox"], tgt_cls], axis=-1)
    h = jnp.maximum(x @ params["w1"] + params["b1"], 0.0)
    h = jnp.maximum(h @ params["w2"] + params["b2"], 0.0)
    out = h @ params["wh"] + params["bh"]
    return jax.nn.sigmoid(out) if apply_sigmoid else out


# --------------------------- deterministic init -------------------------------
def init_params(key, vocab_dim, embed_dim, mlp_config):
    d_in = embed_dim * 2 + 8
    dims = [d_in] + list(mlp_config)
    keys = jax.random.split(key, 2 * len(mlp_config) + 3)
    params = {"class_embed": jax.random.normal(keys[0], (vocab_dim, embed_dim),
                                               jnp.float32)}
    for i in range(len(mlp_config)):
        fan_in = dims[i]
        scale = 1.0 / jnp.sqrt(fan_in)
        params[f"w{i + 1}"] = scale * jax.random.normal(
            keys[2 * i + 1], (dims[i], dims[i + 1]), jnp.float32)
        params[f"b{i + 1}"] = scale * jax.random.normal(
            keys[2 * i + 2], (1, dims[i + 1]), jnp.float32)
    scale = 1.0 / jnp.sqrt(mlp_config[-1])
    params["wh"] = scale * jax.random.normal(keys[-2], (mlp_config[-1], 1),
                                             jnp.float32)
    params["bh"] = scale * jax.random.normal(keys[-1], (1, 1), jnp.float32)
    return params


def _make_batch(key, B, vocab):
    k_sc, k_tc, k_sb, k_tb = jax.random.split(key, 4)
    return {
        "source_class": jax.random.randint(k_sc, (B,), 0, vocab, jnp.int32),
        "target_class": jax.random.randint(k_tc, (B,), 0, vocab, jnp.int32),
        "source_bbox": jax.random.uniform(k_sb, (B, 4), jnp.float32),
        "target_bbox": jax.random.uniform(k_tb, (B, 4), jnp.float32),
    }


if __name__ == "__main__":
    # small synthetic config: VOCAB_DIM=16, EMBEDDING_DIM=28 -> input dim 64,
    # MLP_CONFIG=[64, 32], batch=8
    VOCAB_DIM, EMBEDDING_DIM = 16, 28
    MLP_CONFIG = (64, 32)
    B = 8

    key = jax.random.PRNGKey(0)
    k_par, k_batch, k_big = jax.random.split(key, 3)
    params = init_params(k_par, VOCAB_DIM, EMBEDDING_DIM, MLP_CONFIG)
    batch = _make_batch(k_batch, B, VOCAB_DIM)

    out = jax.block_until_ready(forward(params, batch, apply_sigmoid=False))
    out_sig = jax.block_until_ready(forward(params, batch, apply_sigmoid=True))

    ref = forward_ref(params, batch, apply_sigmoid=False)
    ref_sig = forward_ref(params, batch, apply_sigmoid=True)

    assert out.shape == (B, 1) and out_sig.shape == (B, 1)
    assert jnp.allclose(out, ref, atol=1e-4, rtol=1e-4)
    assert jnp.allclose(out_sig, ref_sig, atol=1e-4, rtol=1e-4)

    # multi-tile check (exercises n_tiles > 1 and the fixed output BlockSpec)
    B2 = 300
    batch2 = _make_batch(k_big, B2, VOCAB_DIM)
    out2 = jax.block_until_ready(
        mlp_pallas(batch2["source_bbox"], batch2["target_bbox"],
                   batch2["source_class"], batch2["target_class"],
                   params, apply_sigmoid=True, tile_b=128))
    ref2 = forward_ref(params, batch2, apply_sigmoid=True)
    assert out2.shape == (B2, 1)
    assert jnp.allclose(out2, ref2, atol=1e-4, rtol=1e-4)

    print("KERNEL_OK")
</pallas_src>

<mosaic_0001>
module attributes {stable_mosaic.version = 11 : i64} {
  func.func @_mlp_kernel(%arg0: i32, %arg1: memref<10x128xf32, #tpu.memory_space<vmem>>, %arg2: memref<65x8xf32, #tpu.memory_space<vmem>>, %arg3: memref<65x32xf32, #tpu.memory_space<vmem>>, %arg4: memref<33x65xf32, #tpu.memory_space<vmem>>, %arg5: memref<33x1xf32, #tpu.memory_space<vmem>>, %arg6: memref<1x128xf32, #tpu.memory_space<vmem>>) attributes {dimension_semantics = [#tpu.dimension_semantics<parallel>], iteration_bounds = array<i64: 1>, scalar_prefetch = 0 : i64, scratch_operands = 0 : i64, tpu.core_type = #tpu.core_type<tc>, window_params = [{transform_indices = @transform_0, window_bounds = array<i64: 10, 128>}, {pipeline_mode = #tpu.pipeline_mode<synchronous>, transform_indices = @transform_1, window_bounds = array<i64: 65, 8>}, {pipeline_mode = #tpu.pipeline_mode<synchronous>, transform_indices = @transform_2, window_bounds = array<i64: 65, 32>}, {pipeline_mode = #tpu.pipeline_mode<synchronous>, transform_indices = @transform_3, window_bounds = array<i64: 33, 65>}, {pipeline_mode = #tpu.pipeline_mode<synchronous>, transform_indices = @transform_4, window_bounds = array<i64: 33, 1>}, {transform_indices = @transform_5, window_bounds = array<i64: 1, 128>}]} {
    %c0 = arith.constant 0 : index
    %c0_0 = arith.constant 0 : index
    %0 = vector.load %arg1[%c0, %c0_0] : memref<10x128xf32, #tpu.memory_space<vmem>>, vector<8x128xf32>
    %c8 = arith.constant 8 : index
    %c0_1 = arith.constant 0 : index
    %1 = vector.load %arg1[%c8, %c0_1] : memref<10x128xf32, #tpu.memory_space<vmem>>, vector<2x128xf32>
    %2 = vector.extract_strided_slice %1 {offsets = [0, 0], sizes = [1, 128], strides = [1, 1]} : vector<2x128xf32> to vector<1x128xf32>
    %3 = arith.fptosi %2 : vector<1x128xf32> to vector<1x128xi32>
    %4 = vector.extract_strided_slice %1 {offsets = [1, 0], sizes = [1, 128], strides = [1, 1]} : vector<2x128xf32> to vector<1x128xf32>
    %5 = arith.fptosi %4 : vector<1x128xf32> to vector<1x128xi32>
    %6 = tpu.iota {dimensions = array<i32: 0>} : vector<32x128xi32>
    %7 = vector.broadcast %3 : vector<1x128xi32> to vector<32x128xi32>
    %8 = arith.cmpi eq, %6, %7 : vector<32x128xi32>
    %c16_i32 = arith.constant 16 : i32
    %9 = vector.broadcast %c16_i32 : i32 to vector<1x128xi32>
    %10 = arith.addi %5, %9 : vector<1x128xi32>
    %11 = vector.broadcast %10 : vector<1x128xi32> to vector<32x128xi32>
    %12 = arith.cmpi eq, %6, %11 : vector<32x128xi32>
    %13 = arith.ori %8, %12 : vector<32x128xi1>
    %14 = arith.extui %13 : vector<32x128xi1> to vector<32x128xi32>
    %15 = arith.sitofp %14 : vector<32x128xi32> to vector<32x128xf32>
    %c0_2 = arith.constant 0 : index
    %c0_3 = arith.constant 0 : index
    %16 = vector.load %arg2[%c0_2, %c0_3] : memref<65x8xf32, #tpu.memory_space<vmem>>, vector<65x8xf32>
    %cst = arith.constant dense<0.000000e+00> : vector<65x128xf32>
    %17 = tpu.matmul %16, %0, %cst {dimension_numbers = #tpu.dot_dimension_numbers<[1], [0], [0], [1], [0, 0, 1, 1], [], []>} : vector<65x8xf32>, vector<8x128xf32>, vector<65x128xf32> -> vector<65x128xf32>
    %c0_4 = arith.constant 0 : index
    %c0_5 = arith.constant 0 : index
    %18 = vector.load %arg3[%c0_4, %c0_5] : memref<65x32xf32, #tpu.memory_space<vmem>>, vector<65x32xf32>
    %cst_6 = arith.constant dense<0.000000e+00> : vector<65x128xf32>
    %19 = tpu.matmul %18, %15, %cst_6 {dimension_numbers = #tpu.dot_dimension_numbers<[1], [0], [0], [1], [0, 0, 1, 1], [], []>} : vector<65x32xf32>, vector<32x128xf32>, vector<65x128xf32> -> vector<65x128xf32>
    %20 = arith.addf %17, %19 : vector<65x128xf32>
    %cst_7 = arith.constant 0.000000e+00 : f32
    %21 = vector.broadcast %cst_7 : f32 to vector<65x128xf32>
    %22 = arith.maximumf %20, %21 : vector<65x128xf32>
    %c0_8 = arith.constant 0 : index
    %c0_9 = arith.constant 0 : index
    %23 = vector.load %arg4[%c0_8, %c0_9] : memref<33x65xf32, #tpu.memory_space<vmem>>, vector<33x65xf32>
    %cst_10 = arith.constant dense<0.000000e+00> : vector<33x128xf32>
    %24 = tpu.matmul %23, %22, %cst_10 {dimension_numbers = #tpu.dot_dimension_numbers<[1], [0], [0], [1], [0, 0, 1, 1], [], []>} : vector<33x65xf32>, vector<65x128xf32>, vector<33x128xf32> -> vector<33x128xf32>
    %cst_11 = arith.constant 0.000000e+00 : f32
    %25 = vector.broadcast %cst_11 : f32 to vector<33x128xf32>
    %26 = arith.maximumf %24, %25 : vector<33x128xf32>
    %c0_12 = arith.constant 0 : index
    %c0_13 = arith.constant 0 : index
    %27 = vector.load %arg5[%c0_12, %c0_13] : memref<33x1xf32, #tpu.memory_space<vmem>>, vector<33x1xf32>
    %28 = vector.broadcast %27 : vector<33x1xf32> to vector<33x128xf32>
    %29 = arith.mulf %26, %28 : vector<33x128xf32>
    %cst_14 = arith.constant dense<0.000000e+00> : vector<128xf32>
    %30 = vector.multi_reduction <add>, %29, %cst_14 [0] : vector<33x128xf32> to vector<128xf32>
    %31 = vector.shape_cast %30 : vector<128xf32> to vector<1x128xf32>
    %c0_15 = arith.constant 0 : index
    %c0_16 = arith.constant 0 : index
    %32 = vector.load %arg6[%c0_15, %c0_16] : memref<1x128xf32, #tpu.memory_space<vmem>>, vector<1x128xf32>
    tpu.vector_store %arg6[%c0_15, %c0_16], %31 {strides = array<i32>} : memref<1x128xf32, #tpu.memory_space<vmem>>, vector<1x128xf32>,
    return
  }
  func.func @transform_0(%arg0: i32) -> (i32, i32) {
    %c0_i32 = arith.constant 0 : i32
    %c0_i32_0 = arith.constant 0 : i32
    return %c0_i32, %arg0 : i32, i32
  }
  func.func @transform_1(%arg0: i32) -> (i32, i32) {
    %c0_i32 = arith.constant 0 : i32
    %c0_i32_0 = arith.constant 0 : i32
    %c0_i32_1 = arith.constant 0 : i32
    return %c0_i32, %c0_i32_0 : i32, i32
  }
  func.func @transform_2(%arg0: i32) -> (i32, i32) {
    %c0_i32 = arith.constant 0 : i32
    %c0_i32_0 = arith.constant 0 : i32
    %c0_i32_1 = arith.constant 0 : i32
    return %c0_i32, %c0_i32_0 : i32, i32
  }
  func.func @transform_3(%arg0: i32) -> (i32, i32) {
    %c0_i32 = arith.constant 0 : i32
    %c0_i32_0 = arith.constant 0 : i32
    %c0_i32_1 = arith.constant 0 : i32
    return %c0_i32, %c0_i32_0 : i32, i32
  }
  func.func @transform_4(%arg0: i32) -> (i32, i32) {
    %c0_i32 = arith.constant 0 : i32
    %c0_i32_0 = arith.constant 0 : i32
    %c0_i32_1 = arith.constant 0 : i32
    return %c0_i32, %c0_i32_0 : i32, i32
  }
  func.func @transform_5(%arg0: i32) -> (i32, i32) {
    %c0_i32 = arith.constant 0 : i32
    %c0_i32_0 = arith.constant 0 : i32
    return %c0_i32, %arg0 : i32, i32
  }
}

</mosaic_0001>

<llo_original>
// kernel: tpu_custom_call.1
$region0: #{tpu_custom_call.1}
  #allocation0 [shape = 'u32[]', space=smem, size = 0x4, offset = 0x4, fixed_abs, tag = 'smem constant byte address 0x4 - core index']
  #allocation1 [shape = 'u32[72,128]{1,0:T(1,128)}', space=vmem, size = 0x9000, scoped, tag = 'internal scratch']
  %s0 = inlined_call_operand.vmem [shape: f32[10,128], index: 0, kind: input, shape index: {}]
  %s1 = inlined_call_operand.vmem [shape: f32[65,8], index: 1, kind: input, shape index: {}]
  %s2 = inlined_call_operand.vmem [shape: f32[65,32], index: 2, kind: input, shape index: {}]
  %s3 = inlined_call_operand.vmem [shape: f32[33,65], index: 3, kind: input, shape index: {}]
  %s4 = inlined_call_operand.vmem [shape: f32[33,1], index: 4, kind: input, shape index: {}]
  %s5 = inlined_call_operand.hbm [shape: f32[1,128], index: 5, kind: output, shape index: {}]
  %s6 = sld [smem:[#allocation0]]
  $region30: #{tpu_custom_call.1} parent=0
    _
  %s8 = ssub.s32 1, %s6
  %s9 = scalar_select 0, %s8, %s6
  $region1: #{tpu_custom_call.1} parent=0
    #allocation2 [shape = 'u8[512]{0}', space=vmem, size = 0x400, scoped, tag = 'output window, operand 0, single buffered']
    #allocation3 [shape = 's32[1]{0}', space=sflag, size = 0x4, scoped, tag = 'scoped memory for tpu_custom_call.1']
    %10 = vsyncpa [#allocation3], 0
    // Predicated region
    $region2: #{tpu_custom_call.1} parent=1 // pred_check
      _
    $region3: #{tpu_custom_call.1} parent=1 // pred_check_branch
      %12 = sbr.rel (0) target = $region5
    $region4: #{tpu_custom_call.1} parent=1 // pred_region
      _
    $region5: #{tpu_custom_call.1} parent=1 // pred_fallthru
      _
    // Predicated region
    $region6: #{tpu_custom_call.1} parent=1 // pred_check
      _
    $region7: #{tpu_custom_call.1} parent=1 // pred_check_branch
      %14 = sbr.rel (0) target = $region9
    $region8: #{tpu_custom_call.1} parent=1 // pred_region
      _
    $region9: #{tpu_custom_call.1} parent=1 // pred_fallthru
      _
    // Predicated region
    $region10: #{tpu_custom_call.1} parent=1 // pred_check
      _
    $region11: #{tpu_custom_call.1} parent=1 // pred_check_branch
      %16 = sbr.rel (0) target = $region13
    $region12: #{tpu_custom_call.1} parent=1 // pred_region
      _
    $region13: #{tpu_custom_call.1} parent=1 // pred_fallthru
      _
    // Predicated region
    $region14: #{tpu_custom_call.1} parent=1 // pred_check
      _
    $region15: #{tpu_custom_call.1} parent=1 // pred_check_branch
      %18 = sbr.rel (0) target = $region17
    $region16: #{tpu_custom_call.1} parent=1 // pred_region
      _
    $region17: #{tpu_custom_call.1} parent=1 // pred_fallthru
      _
    // Predicated region
    $region18: #{tpu_custom_call.1} parent=1 // pred_check
      _
    $region19: #{tpu_custom_call.1} parent=1 // pred_check_branch
      %20 = sbr.rel (0) target = $region21
    $region20: #{tpu_custom_call.1} parent=1 // pred_region
      _
    $region21: #{tpu_custom_call.1} parent=1 // pred_fallthru
      _
    %v21 = vld [vmem:[%s0] sm:$0xff]
    %v22 = vld [vmem:[%s0 + $0x8] sm:$0x3]
    %v23 = vcvt.f32.s32.to.zero.pseudo %v22
    %v24 = vlaneseq
    %v25 = vshrl.u32 %v24, 7
    %v26 = vadd.s32 %v25, 8
    %v27 = vadd.s32 %v25, 16
    %v28 = vadd.s32 %v25, 24
    %v29 = vperm.slane %v23, 0
    %vm30 = vcmp.eq.s32.totalorder %v25, %v29
    %vm31 = vcmp.eq.s32.totalorder %v26, %v29
    %vm32 = vcmp.eq.s32.totalorder %v27, %v29
    %vm33 = vcmp.eq.s32.totalorder %v28, %v29
    %v34 = vadd.s32 %v23, 16
    %v35 = vperm.slane %v34, 1
    %vm36 = vcmp.eq.s32.totalorder %v25, %v35
    %vm37 = vcmp.eq.s32.totalorder %v26, %v35
    %vm38 = vcmp.eq.s32.totalorder %v27, %v35
    %vm39 = vcmp.eq.s32.totalorder %v28, %v35
    %vm40 = vmor %vm30, %vm36
    %vm41 = vmor %vm31, %vm37
    %vm42 = vmor %vm32, %vm38
    %vm43 = vmor %vm33, %vm39
    %v44 = vsel %vm40, 1, 0
    %v45 = vsel %vm41, 1, 0
    %v46 = vsel %vm42, 1, 0
    %v47 = vsel %vm43, 1, 0
    %v48 = vcvt.s32.f32 %v44
    %v49 = vcvt.s32.f32 %v45
    %v50 = vcvt.s32.f32 %v46
    %v51 = vcvt.s32.f32 %v47
    %v52 = vld [vmem:[%s1] sm:$0xff]
    %v53 = vld [vmem:[%s1 + $0x8] sm:$0xff]
    %v54 = vld [vmem:[%s1 + $0x10] sm:$0xff]
    %v55 = vld [vmem:[%s1 + $0x18] sm:$0xff]
    %v56 = vld [vmem:[%s1 + $0x20] sm:$0xff]
    %v57 = vld [vmem:[%s1 + $0x28] sm:$0xff]
    %v58 = vld [vmem:[%s1 + $0x30] sm:$0xff]
    %v59 = vld [vmem:[%s1 + $0x38] sm:$0xff]
    %v60 = vld [vmem:[%s1 + $0x40] sm:$0x1]
    %v61 = vld [vmem:[%s2] sm:$0xff]
    %v62 = vld [vmem:[%s2 + $0x8] sm:$0xff]
    %v63 = vld [vmem:[%s2 + $0x10] sm:$0xff]
    %v64 = vld [vmem:[%s2 + $0x18] sm:$0xff]
    %v65 = vld [vmem:[%s2 + $0x20] sm:$0xff]
    %v66 = vld [vmem:[%s2 + $0x28] sm:$0xff]
    %v67 = vld [vmem:[%s2 + $0x30] sm:$0xff]
    %v68 = vld [vmem:[%s2 + $0x38] sm:$0xff]
    %v69 = vld [vmem:[%s2 + $0x40] sm:$0x1]
    %vm70 = vcmask 261120
    %v72 = vsel %vm70, %v61, 0
    %v75 = vsel %vm70, %v62, 0
    %v78 = vsel %vm70, %v63, 0
    %v81 = vsel %vm70, %v64, 0
    %v84 = vsel %vm70, %v65, 0
    %v87 = vsel %vm70, %v66, 0
    %v90 = vsel %vm70, %v67, 0
    %v93 = vsel %vm70, %v68, 0
    %v96 = vsel %vm70, %v69, 0
    %98 = vmatpush.msra.mxu0 0.0
    %99 = vmatpush.msra.mxu0 0.0
    %100 = vmatpush.msra.mxu0 0.0
    %101 = vmatpush.msra.mxu0 0.0
    %102 = vmatpush.msra.mxu0 0.0
    %103 = vmatpush.msra.mxu0 0.0
    %104 = vmatpush.msra.mxu0 0.0
    %105 = vmatpush.msra.mxu0 0.0
    %106 = vmatpush.msra.mxu0 0.0
    %107 = vmatpush.msra.mxu0 0.0
    %108 = vmatpush.msra.mxu0 0.0
    %109 = vmatpush.msra.mxu0 0.0
    %110 = vmatpush.msra.mxu0 %v51
    %111 = vmatpush.msra.mxu0 %v50
    %112 = vmatpush.msra.mxu0 %v49
    %113 = vmatpush.msra.mxu0 %v48
    %114 = vmatmul.f32.gmra.mxu0 %v72
    %v115 = vpop.f32.mrf.mxu0
    %v116 = vadd.f32 0.0, %v115
    %117 = vmatmul.f32.gmra.mxu0 %v75
    %v118 = vpop.f32.mrf.mxu0
    %v119 = vadd.f32 0.0, %v118
    %120 = vmatmul.f32.gmra.mxu0 %v78
    %v121 = vpop.f32.mrf.mxu0
    %v122 = vadd.f32 0.0, %v121
    %123 = vmatmul.f32.gmra.mxu0 %v81
    %v124 = vpop.f32.mrf.mxu0
    %v125 = vadd.f32 0.0, %v124
    %126 = vmatmul.f32.gmra.mxu0 %v84
    %v127 = vpop.f32.mrf.mxu0
    %v128 = vadd.f32 0.0, %v127
    %129 = vmatmul.f32.gmra.mxu0 %v87
    %v130 = vpop.f32.mrf.mxu0
    %v131 = vadd.f32 0.0, %v130
    %132 = vmatmul.f32.gmra.mxu0 %v90
    %v133 = vpop.f32.mrf.mxu0
    %v134 = vadd.f32 0.0, %v133
    %135 = vmatmul.f32.gmra.mxu0 %v93
    %v136 = vpop.f32.mrf.mxu0
    %v137 = vadd.f32 0.0, %v136
    %138 = vmatmul.f32.gmra.mxu0 %v96
    %v139 = vpop.f32.mrf.mxu0
    %v140 = vadd.f32 0.0, %v139
    %141 = vdwg.mxu0
    %vm142 = vcmask 64512
    %v144 = vsel %vm142, %v52, 0
    %v147 = vsel %vm142, %v53, 0
    %v150 = vsel %vm142, %v54, 0
    %v153 = vsel %vm142, %v55, 0
    %v156 = vsel %vm142, %v56, 0
    %v159 = vsel %vm142, %v57, 0
    %v162 = vsel %vm142, %v58, 0
    %v165 = vsel %vm142, %v59, 0
    %v168 = vsel %vm142, %v60, 0
    %170 = vmatpush.msra.mxu0 0.0
    %171 = vmatpush.msra.mxu0 0.0
    %172 = vmatpush.msra.mxu0 0.0
    %173 = vmatpush.msra.mxu0 0.0
    %174 = vmatpush.msra.mxu0 0.0
    %175 = vmatpush.msra.mxu0 0.0
    %176 = vmatpush.msra.mxu0 0.0
    %177 = vmatpush.msra.mxu0 0.0
    %178 = vmatpush.msra.mxu0 0.0
    %179 = vmatpush.msra.mxu0 0.0
    %180 = vmatpush.msra.mxu0 0.0
    %181 = vmatpush.msra.mxu0 0.0
    %182 = vmatpush.msra.mxu0 0.0
    %183 = vmatpush.msra.mxu0 0.0
    %184 = vmatpush.msra.mxu0 0.0
    %185 = vmatpush.msra.mxu0 %v21
    %186 = vmatmul.f32.gmra.mxu0 %v144
    %v187 = vpop.f32.mrf.mxu0
    %v188 = vadd.f32 %v116, %v187
    %189 = vmatmul.f32.gmra.mxu0 %v147
    %v190 = vpop.f32.mrf.mxu0
    %v191 = vadd.f32 %v119, %v190
    %192 = vmatmul.f32.gmra.mxu0 %v150
    %v193 = vpop.f32.mrf.mxu0
    %v194 = vadd.f32 %v122, %v193
    %195 = vmatmul.f32.gmra.mxu0 %v153
    %v196 = vpop.f32.mrf.mxu0
    %v197 = vadd.f32 %v125, %v196
    %198 = vmatmul.f32.gmra.mxu0 %v156
    %v199 = vpop.f32.mrf.mxu0
    %v200 = vadd.f32 %v128, %v199
    %201 = vmatmul.f32.gmra.mxu0 %v159
    %v202 = vpop.f32.mrf.mxu0
    %v203 = vadd.f32 %v131, %v202
    %204 = vmatmul.f32.gmra.mxu0 %v162
    %v205 = vpop.f32.mrf.mxu0
    %v206 = vadd.f32 %v134, %v205
    %207 = vmatmul.f32.gmra.mxu0 %v165
    %v208 = vpop.f32.mrf.mxu0
    %v209 = vadd.f32 %v137, %v208
    %210 = vmatmul.f32.gmra.mxu0 %v168
    %v211 = vpop.f32.mrf.mxu0
    %v212 = vadd.f32 %v140, %v211
    %213 = vdwg.mxu0
    %v214 = vmax.f32 %v188, 0.0
    %v215 = vmax.f32 %v191, 0.0
    %v216 = vmax.f32 %v194, 0.0
    %v217 = vmax.f32 %v197, 0.0
    %v218 = vmax.f32 %v200, 0.0
    %v219 = vmax.f32 %v203, 0.0
    %v220 = vmax.f32 %v206, 0.0
    %v221 = vmax.f32 %v209, 0.0
    %v222 = vmax.f32 %v212, 0.0
    %v223 = vld [vmem:[%s3] sm:$0xff]
    %v224 = vld [vmem:[%s3 + $0x8] sm:$0xff]
    %v225 = vld [vmem:[%s3 + $0x10] sm:$0xff]
    %v226 = vld [vmem:[%s3 + $0x18] sm:$0xff]
    %v227 = vld [vmem:[%s3 + $0x20] sm:$0x1]
    %vm228 = vcmask 531456
    %v230 = vsel %vm228, %v223, 0
    %v233 = vsel %vm228, %v224, 0
    %v236 = vsel %vm228, %v225, 0
    %v239 = vsel %vm228, %v226, 0
    %v242 = vsel %vm228, %v227, 0
    %vm244 = vcmask 1040384
    %v246 = vsel %vm244, %v222, 0
    %248 = vmatpush.msra.mxu0 0.0
    %249 = vmatpush.msra.mxu0 0.0
    %250 = vmatpush.msra.mxu0 0.0
    %251 = vmatpush.msra.mxu0 0.0
    %252 = vmatpush.msra.mxu0 0.0
    %253 = vmatpush.msra.mxu0 0.0
    %254 = vmatpush.msra.mxu0 0.0
    %255 = vmatpush.msra.mxu0 %v246
    %256 = vmatpush.msra.mxu0 %v221
    %257 = vmatpush.msra.mxu0 %v220
    %258 = vmatpush.msra.mxu0 %v219
    %259 = vmatpush.msra.mxu0 %v218
    %260 = vmatpush.msra.mxu0 %v217
    %261 = vmatpush.msra.mxu0 %v216
    %262 = vmatpush.msra.mxu0 %v215
    %263 = vmatpush.msra.mxu0 %v214
    %264 = vmatmul.f32.gmra.mxu0 %v230
    %v265 = vpop.f32.mrf.mxu0
    %v266 = vadd.f32 0.0, %v265
    %267 = vmatmul.f32.gmra.mxu0 %v233
    %v268 = vpop.f32.mrf.mxu0
    %v269 = vadd.f32 0.0, %v268
    %270 = vmatmul.f32.gmra.mxu0 %v236
    %v271 = vpop.f32.mrf.mxu0
    %v272 = vadd.f32 0.0, %v271
    %273 = vmatmul.f32.gmra.mxu0 %v239
    %v274 = vpop.f32.mrf.mxu0
    %v275 = vadd.f32 0.0, %v274
    %276 = vmatmul.f32.gmra.mxu0 %v242
    %v277 = vpop.f32.mrf.mxu0
    %v278 = vadd.f32 0.0, %v277
    %279 = vdwg.mxu0
    %v280 = vmax.f32 %v266, 0.0
    %v281 = vmax.f32 %v269, 0.0
    %v282 = vmax.f32 %v272, 0.0
    %v283 = vmax.f32 %v275, 0.0
    %v284 = vmax.f32 %v278, 0.0
    %v285 = vld [vmem:[%s4] sm:$0xff]
    %v286 = vld [vmem:[%s4 + $0x8] sm:$0xff]
    %v287 = vld [vmem:[%s4 + $0x10] sm:$0xff]
    %v288 = vld [vmem:[%s4 + $0x18] sm:$0xff]
    %v289 = vld [vmem:[%s4 + $0x20] sm:$0x1]
    %291 = vset.pattern.permute.xlu0 0
    %292 = vperm.xlu0 %291, %v285
    %v293 = vpop.permute.xlu0 %292
    %296 = vset.pattern.permute.xlu0 0
    %297 = vperm.xlu0 %296, %v286
    %v298 = vpop.permute.xlu0 %297
    %301 = vset.pattern.permute.xlu0 0
    %302 = vperm.xlu0 %301, %v287
    %v303 = vpop.permute.xlu0 %302
    %306 = vset.pattern.permute.xlu0 0
    %307 = vperm.xlu0 %306, %v288
    %v308 = vpop.permute.xlu0 %307
    %311 = vset.pattern.permute.xlu0 0
    %312 = vperm.xlu0 %311, %v289
    %v313 = vpop.permute.xlu0 %312
    %v315 = vmul.f32 %v280, %v293
    %v316 = vmul.f32 %v281, %v298
    %v317 = vmul.f32 %v282, %v303
    %v318 = vmul.f32 %v283, %v308
    %v319 = vmul.f32 %v284, %v313
    %v320 = vadd.f32 %v315, %v316
    %v321 = vadd.f32 %v320, %v317
    %v322 = vadd.f32 %v321, %v318
    %v323 = vsel %vm244, %v319, 0.0
    %v324 = vadd.f32 %v322, %v323
    %v325 = vrot.slane %v324, 4
    %v326 = vadd.f32 %v324, %v325
    %v327 = vrot.slane %v326, 2
    %v328 = vadd.f32 %v326, %v327
    %v329 = vrot.slane %v328, 1
    %v330 = vadd.f32 %v328, %v329
    %331 = vst [vmem:[#allocation2] sm:$0x1] %v330
    // Predicated region
    $region22: #{tpu_custom_call.1} parent=1 // pred_check
      _
    $region23: #{tpu_custom_call.1} parent=1 // pred_check_branch
      %333 = sbr.rel (0) target = $region25
    $region24: #{tpu_custom_call.1} parent=1 // pred_region
      %335 = vsyncadd [#allocation3], 0
      %s337 = sshll.u32 [#allocation2], 4
      %s338 = int_to_ptr.vmem [resolvable:$true] %s337
      %s339 = sshll.u32 %s5, 4
      %s340 = int_to_ptr.hbm [resolvable:$true] %s339
      %342 = dma.vmem_to_hbm [thread:$0]  %s338, 16, %s340, [#allocation3]
    $region25: #{tpu_custom_call.1} parent=1 // pred_fallthru
      _
    // Predicated region
    $region26: #{tpu_custom_call.1} parent=1 // pred_check
      _
    $region27: #{tpu_custom_call.1} parent=1 // pred_check_branch
      %344 = sbr.rel (0) target = $region29
    $region28: #{tpu_custom_call.1} parent=1 // pred_region
      %346 = dma.done [#allocation3], 16
    $region29: #{tpu_custom_call.1} parent=1 // pred_fallthru
      _
    %347 = vsyncpa [#allocation3], 1

</llo_original>
